<compile_context>
chip_gen: v6e
topology: v6e:2x2x1
jax: 0.10.0
libtpu: 0.0.40
codegen_flags: <defaults>
</compile_context>

<pallas_src>
import functools
import math

import jax
import jax.numpy as jnp
from jax import lax
from jax.experimental import pallas as pl
from jax.experimental.pallas import tpu as pltpu


def _round_up(x: int, m: int) -> int:
    return ((x + m - 1) // m) * m


def _vmem_budget_bytes() -> int:
    """~80% of this generation's physical VMEM (falls back to 64 MiB)."""
    try:
        cap = int(pltpu.get_tpu_info().vmem_capacity_bytes)
    except Exception:  # older jax / non-TPU tracing environments
        cap = 64 << 20
    return max(16 << 20, int(0.8 * cap))


# --------------------------------------------------------------------------------------
# Path 1: small vocab — VMEM-resident table, one-hot MXU gather.
# --------------------------------------------------------------------------------------
def _embed_onehot_kernel(ids_ref, table_ref, out_ref, *, scale, precision):
    """ids_ref: (tile, 1) int32 | table_ref: (vocab, d_model) | out_ref: (tile, d_model)."""
    tile, _ = out_ref.shape
    vocab = table_ref.shape[0]

    ids = ids_ref[...]                                           # (tile, 1) int32
    col = lax.broadcasted_iota(jnp.int32, (tile, vocab), 1)      # (tile, vocab)
    # Fold sqrt(d_model) into the one-hot: the select already runs per (tile, vocab)
    # element, so this removes a full (tile, d_model) VPU multiply per grid step.
    onehot = jnp.where(col == ids, scale, 0.0).astype(table_ref.dtype)
    gathered = jnp.dot(
        onehot,
        table_ref[...],
        preferred_element_type=jnp.float32,
        precision=precision,                                     # HIGHEST only for f32 tables
    )                                                            # (tile, d_model) f32
    out_ref[...] = gathered.astype(out_ref.dtype)


# --------------------------------------------------------------------------------------
# Path 2: large vocab — HBM-resident table, per-row DMA gather (P4-style).
# --------------------------------------------------------------------------------------
def _embed_gather_kernel(ids_ref, table_ref, out_ref, gbuf_ref, sem_ref, *, scale, window):
    """ids_ref: (n_pad,) int32 SMEM (scalar-prefetched)
    table_ref: (vocab, d_model) in HBM (memory_space=pl.ANY)
    out_ref  : (tile, d_model) VMEM output block
    gbuf_ref : (tile, d_model) VMEM gather scratch
    sem_ref  : DMA semaphore (all row copies are the same size)."""
    tile, _ = out_ref.shape
    base = pl.program_id(0) * tile

    def row_copy(r):
        tok = ids_ref[base + r]
        return pltpu.make_async_copy(
            table_ref.at[pl.ds(tok, 1), :],
            gbuf_ref.at[pl.ds(r, 1), :],
            sem_ref,
        )

    def wait_one():
        # Wait descriptor only needs matching shapes; all row copies are identical size.
        pltpu.make_async_copy(
            table_ref.at[pl.ds(0, 1), :],
            gbuf_ref.at[pl.ds(0, 1), :],
            sem_ref,
        ).wait()

    # Prologue: fill the in-flight window (static unroll, <= window rows).
    prologue = min(window, tile)
    for r in range(prologue):
        row_copy(r).start()

    # Steady state: wait row r, issue row r + window (bounded in-flight DMA count).
    def body(r, carry):
        wait_one()

        @pl.when(r + window < tile)
        def _():
            row_copy(r + window).start()

        return carry

    lax.fori_loop(0, tile, body, 0)

    out_ref[...] = (gbuf_ref[...].astype(jnp.float32) * scale).astype(out_ref.dtype)


# --------------------------------------------------------------------------------------
# Wrapper
# --------------------------------------------------------------------------------------
def input_embedding(ids, table, *, out_dtype=None, onehot_max_vocab=512, force_gather=False):
    """ids: (B, S) int; table: (vocab, d_model).

    Returns (B, S, d_model) == table[ids] * sqrt(d_model) in `out_dtype`
    (defaults to table.dtype; pass jnp.bfloat16 to halve output HBM traffic when
    downstream consumes bf16).
    """
    B, S = ids.shape
    vocab, d_model = table.shape
    out_dtype = table.dtype if out_dtype is None else jnp.dtype(out_dtype)
    table_bytes = jnp.dtype(table.dtype).itemsize
    out_bytes = jnp.dtype(out_dtype).itemsize
    scale = float(math.sqrt(d_model))

    num_tokens = B * S
    budget = _vmem_budget_bytes()

    # ------------------------------ path selection --------------------------------
    use_onehot = (not force_gather) and (vocab <= onehot_max_vocab)
    if use_onehot:
        # Large token tile: ~2 MiB output block, and bound the (tile, vocab) one-hot
        # intermediate to ~4 MiB.
        tile = min((2 << 20) // max(d_model * out_bytes, 1),
                   (4 << 20) // max(4 * vocab, 1))
        tile = max(8, (tile // 8) * 8)
        tile = min(tile, _round_up(num_tokens, 8))
        need = (
            2 * vocab * d_model * table_bytes      # resident table (double-buffered, worst case)
            + 2 * tile * d_model * out_bytes       # output blocks
            + 2 * tile * 4                         # id blocks
            + 2 * tile * vocab * 4                 # iota + one-hot intermediates
            + tile * d_model * 4                   # f32 matmul result
        )
        if need > budget:
            use_onehot = False                     # fall back to the DMA-gather path

    if use_onehot:
        n_pad = _round_up(num_tokens, tile)
        ids_flat = ids.reshape(num_tokens).astype(jnp.int32)
        if n_pad != num_tokens:
            ids_flat = jnp.pad(ids_flat, (0, n_pad - num_tokens))
        ids_col = ids_flat[:, None]                # (n_pad, 1)

        precision = (lax.Precision.HIGHEST
                     if jnp.dtype(table.dtype) == jnp.dtype(jnp.float32)
                     else lax.Precision.DEFAULT)
        vmem_limit = int(min(budget, max(16 << 20, 1.5 * need)))

        out = pl.pallas_call(
            functools.partial(_embed_onehot_kernel, scale=scale, precision=precision),
            out_shape=jax.ShapeDtypeStruct((n_pad, d_model), out_dtype),
            grid=(n_pad // tile,),
            in_specs=[
                pl.BlockSpec((tile, 1), lambda i: (i, 0)),
                pl.BlockSpec((vocab, d_model), lambda i: (0, 0)),   # constant block
            ],
            out_specs=pl.BlockSpec((tile, d_model), lambda i: (i, 0)),
            compiler_params=pltpu.CompilerParams(
                dimension_semantics=("parallel",),
                vmem_limit_bytes=vmem_limit,
            ),
        )(ids_col, table)
        return out[:num_tokens].reshape(B, S, d_model)

    # ------------------------------ DMA-gather path --------------------------------
    tile = (2 << 20) // max(d_model * out_bytes, 1)
    tile = max(8, min((tile // 8) * 8, 1024))      # cap per-step DMA descriptor count
    tile = min(tile, _round_up(num_tokens, 8))
    n_pad = _round_up(num_tokens, tile)

    # Clamp ids so no DMA can read outside the table (see TODO above).
    ids_flat = jnp.clip(ids.reshape(num_tokens).astype(jnp.int32), 0, vocab - 1)
    if n_pad != num_tokens:
        ids_flat = jnp.pad(ids_flat, (0, n_pad - num_tokens))

    need = (tile * d_model * table_bytes           # gather scratch
            + 2 * tile * d_model * out_bytes       # output blocks
            + tile * d_model * 4)                  # f32 scale intermediate
    vmem_limit = int(min(budget, max(16 << 20, 1.5 * need)))
    window = min(16, tile)

    out = pl.pallas_call(
        functools.partial(_embed_gather_kernel, scale=scale, window=window),
        out_shape=jax.ShapeDtypeStruct((n_pad, d_model), out_dtype),
        grid_spec=pltpu.PrefetchScalarGridSpec(
            num_scalar_prefetch=1,                 # ids -> SMEM, visible to kernel
            grid=(n_pad // tile,),
            in_specs=[pl.BlockSpec(memory_space=pl.ANY)],            # table stays in HBM
            out_specs=pl.BlockSpec((tile, d_model), lambda i, ids: (i, 0)),
            scratch_shapes=[
                pltpu.VMEM((tile, d_model), table.dtype),
                pltpu.SemaphoreType.DMA,
            ],
        ),
        compiler_params=pltpu.CompilerParams(
            dimension_semantics=("arbitrary",),
            vmem_limit_bytes=vmem_limit,
        ),
    )(ids_flat, table)
    return out[:num_tokens].reshape(B, S, d_model)


if __name__ == "__main__":
    # Small shapes consistent with the module: batch=2, seq=8, vocab=32, d_model=128.
    batch, seq, vocab_size, d_model = 2, 8, 32, 128

    key = jax.random.PRNGKey(0)
    k_ids, k_tab = jax.random.split(key)

    # Deterministic synthetic parameters (nn.Embedding weight ~ N(0, 1)).
    table = jax.random.normal(k_tab, (vocab_size, d_model), dtype=jnp.float32)
    ids = jax.random.randint(k_ids, (batch, seq), 0, vocab_size, dtype=jnp.int32)

    # Pure-JAX reference for the forward pass.
    ref = jnp.take(table, ids.reshape(-1), axis=0).reshape(
        batch, seq, d_model
    ) * math.sqrt(d_model)

    # Small-vocab path (VMEM-resident table, one-hot MXU gather).
    out = jax.block_until_ready(input_embedding(ids, table))
    assert out.shape == (batch, seq, d_model)
    assert out.dtype == jnp.float32
    assert jnp.allclose(out, ref, atol=1e-4, rtol=1e-5), float(jnp.max(jnp.abs(out - ref)))

    # Large-vocab path (HBM table + per-row DMA gather), forced at the same small shapes.
    out_g = jax.block_until_ready(input_embedding(ids, table, force_gather=True))
    assert out_g.shape == (batch, seq, d_model)
    assert jnp.allclose(out_g, ref, atol=1e-5, rtol=1e-6), float(jnp.max(jnp.abs(out_g - ref)))

    print("KERNEL_OK")
</pallas_src>

<mosaic_0001>
module attributes {stable_mosaic.version = 11 : i64} {
  func.func @_embed_onehot_kernel(%arg0: i32, %arg1: memref<16x1xi32, #tpu.memory_space<vmem>>, %arg2: memref<32x128xf32, #tpu.memory_space<vmem>>, %arg3: memref<16x128xf32, #tpu.memory_space<vmem>>) attributes {dimension_semantics = [#tpu.dimension_semantics<parallel>], iteration_bounds = array<i64: 1>, scalar_prefetch = 0 : i64, scratch_operands = 0 : i64, tpu.core_type = #tpu.core_type<tc>, window_params = [{transform_indices = @transform_0, window_bounds = array<i64: 16, 1>}, {pipeline_mode = #tpu.pipeline_mode<synchronous>, transform_indices = @transform_1, window_bounds = array<i64: 32, 128>}, {transform_indices = @transform_2, window_bounds = array<i64: 16, 128>}]} {
    %c0 = arith.constant 0 : index
    %c0_0 = arith.constant 0 : index
    %0 = vector.load %arg1[%c0, %c0_0] : memref<16x1xi32, #tpu.memory_space<vmem>>, vector<16x1xi32>
    %1 = tpu.iota {dimensions = array<i32: 1>} : vector<16x32xi32>
    %2 = vector.broadcast %0 : vector<16x1xi32> to vector<16x32xi32>
    %3 = arith.cmpi eq, %1, %2 : vector<16x32xi32>
    %cst = arith.constant 11.3137083 : f32
    %cst_1 = arith.constant 0.000000e+00 : f32
    %4 = vector.broadcast %cst : f32 to vector<16x32xf32>
    %5 = vector.broadcast %cst_1 : f32 to vector<16x32xf32>
    %6 = arith.select %3, %4, %5 : vector<16x32xi1>, vector<16x32xf32>
    %c0_2 = arith.constant 0 : index
    %c0_3 = arith.constant 0 : index
    %7 = vector.load %arg2[%c0_2, %c0_3] : memref<32x128xf32, #tpu.memory_space<vmem>>, vector<32x128xf32>
    %cst_4 = arith.constant dense<0.000000e+00> : vector<16x128xf32>
    %8 = tpu.matmul %6, %7, %cst_4 {dimension_numbers = #tpu.dot_dimension_numbers<[1], [0], [0], [1], [0, 0, 1, 1], [], []>, precision = #tpu.contract_precision<fp32>} : vector<16x32xf32>, vector<32x128xf32>, vector<16x128xf32> -> vector<16x128xf32>
    %c0_5 = arith.constant 0 : index
    %c0_6 = arith.constant 0 : index
    %9 = vector.load %arg3[%c0_5, %c0_6] : memref<16x128xf32, #tpu.memory_space<vmem>>, vector<16x128xf32>
    tpu.vector_store %arg3[%c0_5, %c0_6], %8 {strides = array<i32>} : memref<16x128xf32, #tpu.memory_space<vmem>>, vector<16x128xf32>,
    return
  }
  func.func @transform_0(%arg0: i32) -> (i32, i32) {
    %c0_i32 = arith.constant 0 : i32
    %c0_i32_0 = arith.constant 0 : i32
    return %arg0, %c0_i32 : i32, i32
  }
  func.func @transform_1(%arg0: i32) -> (i32, i32) {
    %c0_i32 = arith.constant 0 : i32
    %c0_i32_0 = arith.constant 0 : i32
    %c0_i32_1 = arith.constant 0 : i32
    return %c0_i32, %c0_i32_0 : i32, i32
  }
  func.func @transform_2(%arg0: i32) -> (i32, i32) {
    %c0_i32 = arith.constant 0 : i32
    %c0_i32_0 = arith.constant 0 : i32
    return %arg0, %c0_i32 : i32, i32
  }
}

</mosaic_0001>

<llo_original>
// kernel: tpu_custom_call.1
$region0: #{tpu_custom_call.1}
  #allocation0 [shape = 'u32[]', space=smem, size = 0x4, offset = 0x4, fixed_abs, tag = 'smem constant byte address 0x4 - core index']
  #allocation1 [shape = 'u32[144,128]{1,0:T(1,128)}', space=vmem, size = 0x12000, scoped, tag = 'internal scratch']
  %s0 = inlined_call_operand.vmem [shape: s32[16,1], index: 0, kind: input, shape index: {}]
  %s1 = inlined_call_operand.hbm [shape: f32[32,128], index: 1, kind: input, shape index: {}]
  %s2 = inlined_call_operand.hbm [shape: f32[16,128], index: 2, kind: output, shape index: {}]
  %s3 = sld [smem:[#allocation0]]
  $region22: #{tpu_custom_call.1} parent=0
    _
  %s5 = ssub.s32 1, %s3
  %s6 = scalar_select 0, %s5, %s3
  $region1: #{tpu_custom_call.1} parent=0
    #allocation2 [shape = 'u8[16384]{0}', space=vmem, size = 0x4000, scoped, tag = 'input window, operand 1, single buffered']
    #allocation3 [shape = 's32[1]{0}', space=sflag, size = 0x4, scoped, tag = 'scoped memory for tpu_custom_call.1']
    #allocation4 [shape = 's32[1]{0}', space=sflag, size = 0x4, scoped, tag = 'scoped memory for tpu_custom_call.1']
    #allocation5 [shape = 'u8[8192]{0}', space=vmem, size = 0x2000, scoped, tag = 'output window, operand 0, single buffered']
    %7 = vsyncpa [#allocation3], 0
    %8 = vsyncpa [#allocation4], 0
    // Predicated region
    $region2: #{tpu_custom_call.1} parent=1 // pred_check
      _
    $region3: #{tpu_custom_call.1} parent=1 // pred_check_branch
      %10 = sbr.rel (0) target = $region5
    $region4: #{tpu_custom_call.1} parent=1 // pred_region
      _
    $region5: #{tpu_custom_call.1} parent=1 // pred_fallthru
      _
    // Predicated region
    $region6: #{tpu_custom_call.1} parent=1 // pred_check
      _
    $region7: #{tpu_custom_call.1} parent=1 // pred_check_branch
      %12 = sbr.rel (0) target = $region9
    $region8: #{tpu_custom_call.1} parent=1 // pred_region
      %s14 = ssub.s32 512, 512
      %15 = vsyncadd [#allocation3], %s14
      %s16 = sshll.u32 [#allocation2], 4
      %s17 = int_to_ptr.vmem [resolvable:$true] %s16
      %22 = dma.hbm_to_vmem [thread:$0]  %s1, 512, %s17, [#allocation3], 128, 128, 8
    $region9: #{tpu_custom_call.1} parent=1 // pred_fallthru
      _
    // Predicated region
    $region10: #{tpu_custom_call.1} parent=1 // pred_check
      _
    $region11: #{tpu_custom_call.1} parent=1 // pred_check_branch
      %24 = sbr.rel (0) target = $region13
    $region12: #{tpu_custom_call.1} parent=1 // pred_region
      %25 = dma.done [#allocation3], 512
    $region13: #{tpu_custom_call.1} parent=1 // pred_fallthru
      _
    %v26 = vld [vmem:[%s0] sm:$0xff]
    %v27 = vld [vmem:[%s0 + $0x8] sm:$0xff]
    %v28 = vlaneseq
    %v29 = vand.u32 %v28, 127
    %30 = vset.pattern.permute.xlu0 0
    %31 = vperm.xlu0 %30, %v26
    %v32 = vpop.permute.xlu0 %31
    %33 = vset.pattern.permute.xlu0 0
    %34 = vperm.xlu0 %33, %v27
    %v35 = vpop.permute.xlu0 %34
    %vm36 = vcmp.eq.s32.totalorder %v29, %v32
    %vm37 = vcmp.eq.s32.totalorder %v29, %v35
    %v38 = vsel %vm36, 11.313708, 0.0
    %v39 = vsel %vm37, 11.313708, 0.0
    %v40 = vld [vmem:[#allocation2] sm:$0xff]
    %v41 = vld [vmem:[#allocation2 + $0x8] sm:$0xff]
    %v42 = vld [vmem:[#allocation2 + $0x10] sm:$0xff]
    %v43 = vld [vmem:[#allocation2 + $0x18] sm:$0xff]
    %vm44 = vcmask 261120
    %v46 = vsel %vm44, %v38, 0
    %v49 = vsel %vm44, %v39, 0
    %51 = vmatprep.subr.mxu0 0.0
    %52 = vmatpush1.msra.mxu0 0.0
    %53 = vmatprep.subr.mxu0 0.0
    %54 = vmatpush1.msra.mxu0 0.0
    %55 = vmatprep.subr.mxu0 0.0
    %56 = vmatpush1.msra.mxu0 0.0
    %57 = vmatprep.subr.mxu0 0.0
    %58 = vmatpush1.msra.mxu0 0.0
    %59 = vmatprep.subr.mxu0 0.0
    %60 = vmatpush1.msra.mxu0 0.0
    %61 = vmatprep.subr.mxu0 0.0
    %62 = vmatpush1.msra.mxu0 0.0
    %63 = vmatprep.subr.mxu0 0.0
    %64 = vmatpush1.msra.mxu0 0.0
    %65 = vmatprep.subr.mxu0 0.0
    %66 = vmatpush1.msra.mxu0 0.0
    %67 = vmatprep.subr.mxu0 0.0
    %68 = vmatpush1.msra.mxu0 0.0
    %69 = vmatprep.subr.mxu0 0.0
    %70 = vmatpush1.msra.mxu0 0.0
    %71 = vmatprep.subr.mxu0 0.0
    %72 = vmatpush1.msra.mxu0 0.0
    %73 = vmatprep.subr.mxu0 0.0
    %74 = vmatpush1.msra.mxu0 0.0
    %75 = vmatprep.subr.mxu0 0.0
    %v76 = vand.u32 %v43, 4294901760
    %77 = vmatpush1.msra.mxu0 %v76
    %78 = vmatprep.subr.mxu0 0.0
    %v79 = vand.u32 %v42, 4294901760
    %80 = vmatpush1.msra.mxu0 %v79
    %81 = vmatprep.subr.mxu0 0.0
    %v82 = vand.u32 %v41, 4294901760
    %83 = vmatpush1.msra.mxu0 %v82
    %84 = vmatprep.subr.mxu0 0.0
    %v85 = vand.u32 %v40, 4294901760
    %86 = vmatpush1.msra.mxu0 %v85
    %87 = vmatprep.subr.mxu0 0.0
    %88 = vmatpush2.msra.mxu0 0.0
    %89 = vmatprep.subr.mxu0 0.0
    %90 = vmatpush2.msra.mxu0 0.0
    %91 = vmatprep.subr.mxu0 0.0
    %92 = vmatpush2.msra.mxu0 0.0
    %93 = vmatprep.subr.mxu0 0.0
    %94 = vmatpush2.msra.mxu0 0.0
    %95 = vmatprep.subr.mxu0 0.0
    %96 = vmatpush2.msra.mxu0 0.0
    %97 = vmatprep.subr.mxu0 0.0
    %98 = vmatpush2.msra.mxu0 0.0
    %99 = vmatprep.subr.mxu0 0.0
    %100 = vmatpush2.msra.mxu0 0.0
    %101 = vmatprep.subr.mxu0 0.0
    %102 = vmatpush2.msra.mxu0 0.0
    %103 = vmatprep.subr.mxu0 0.0
    %104 = vmatpush2.msra.mxu0 0.0
    %105 = vmatprep.subr.mxu0 0.0
    %106 = vmatpush2.msra.mxu0 0.0
    %107 = vmatprep.subr.mxu0 0.0
    %108 = vmatpush2.msra.mxu0 0.0
    %109 = vmatprep.subr.mxu0 0.0
    %110 = vmatpush2.msra.mxu0 0.0
    %111 = vmatprep.subr.mxu0 0.0
    %112 = vmatpush2.msra.mxu0 0.0
    %113 = vmatprep.subr.mxu0 0.0
    %114 = vmatpush2.msra.mxu0 0.0
    %115 = vmatprep.subr.mxu0 0.0
    %116 = vmatpush2.msra.mxu0 0.0
    %117 = vmatprep.subr.mxu0 0.0
    %118 = vmatpush2.msra.mxu0 0.0
    %119 = vmatprep.mubr.f32.mxu0 0.0
    %v120 = vand.u32 %v46, 4294901760
    %v121 = vsub.f32 %v46, %v120
    %v122 = vand.u32 %v121, 4294901760
    %v123 = vsub.f32 %v121, %v122
    %v124 = vand.u32 %v123, 4294901760
    %125 = vmatmul.mubr.f32.gmra.mxu0 %v124
    %v126 = vpop.f32.mrf.mxu0
    %v127 = vadd.f32 0.0, %v126
    %v128 = vpop.f32.mrf.mxu0
    %129 = vmatprep.mubr.f32.mxu0 0.0
    %v130 = vand.u32 %v49, 4294901760
    %v131 = vsub.f32 %v49, %v130
    %v132 = vand.u32 %v131, 4294901760
    %v133 = vsub.f32 %v131, %v132
    %v134 = vand.u32 %v133, 4294901760
    %135 = vmatmul.mubr.f32.gmra.mxu0 %v134
    %v136 = vpop.f32.mrf.mxu0
    %v137 = vadd.f32 0.0, %v136
    %v138 = vpop.f32.mrf.mxu0
    %139 = vdwg.mxu0
    %140 = vmatprep.subr.mxu0 0.0
    %141 = vmatpush1.msra.mxu0 0.0
    %142 = vmatprep.subr.mxu0 0.0
    %143 = vmatpush1.msra.mxu0 0.0
    %144 = vmatprep.subr.mxu0 0.0
    %145 = vmatpush1.msra.mxu0 0.0
    %146 = vmatprep.subr.mxu0 0.0
    %147 = vmatpush1.msra.mxu0 0.0
    %148 = vmatprep.subr.mxu0 0.0
    %149 = vmatpush1.msra.mxu0 0.0
    %150 = vmatprep.subr.mxu0 0.0
    %151 = vmatpush1.msra.mxu0 0.0
    %152 = vmatprep.subr.mxu0 0.0
    %153 = vmatpush1.msra.mxu0 0.0
    %154 = vmatprep.subr.mxu0 0.0
    %155 = vmatpush1.msra.mxu0 0.0
    %156 = vmatprep.subr.mxu0 0.0
    %157 = vmatpush1.msra.mxu0 0.0
    %158 = vmatprep.subr.mxu0 0.0
    %159 = vmatpush1.msra.mxu0 0.0
    %160 = vmatprep.subr.mxu0 0.0
    %161 = vmatpush1.msra.mxu0 0.0
    %162 = vmatprep.subr.mxu0 0.0
    %163 = vmatpush1.msra.mxu0 0.0
    %164 = vmatprep.subr.mxu0 0.0
    %v165 = vand.u32 %v43, 4294901760
    %v166 = vsub.f32 %v43, %v165
    %v167 = vand.u32 %v166, 4294901760
    %v168 = vsub.f32 %v166, %v167
    %v169 = vand.u32 %v168, 4294901760
    %170 = vmatpush1.msra.mxu0 %v169
    %171 = vmatprep.subr.mxu0 0.0
    %v172 = vand.u32 %v42, 4294901760
    %v173 = vsub.f32 %v42, %v172
    %v174 = vand.u32 %v173, 4294901760
    %v175 = vsub.f32 %v173, %v174
    %v176 = vand.u32 %v175, 4294901760
    %177 = vmatpush1.msra.mxu0 %v176
    %178 = vmatprep.subr.mxu0 0.0
    %v179 = vand.u32 %v41, 4294901760
    %v180 = vsub.f32 %v41, %v179
    %v181 = vand.u32 %v180, 4294901760
    %v182 = vsub.f32 %v180, %v181
    %v183 = vand.u32 %v182, 4294901760
    %184 = vmatpush1.msra.mxu0 %v183
    %185 = vmatprep.subr.mxu0 0.0
    %v186 = vand.u32 %v40, 4294901760
    %v187 = vsub.f32 %v40, %v186
    %v188 = vand.u32 %v187, 4294901760
    %v189 = vsub.f32 %v187, %v188
    %v190 = vand.u32 %v189, 4294901760
    %191 = vmatpush1.msra.mxu0 %v190
    %192 = vmatprep.subr.mxu0 0.0
    %193 = vmatpush2.msra.mxu0 0.0
    %194 = vmatprep.subr.mxu0 0.0
    %195 = vmatpush2.msra.mxu0 0.0
    %196 = vmatprep.subr.mxu0 0.0
    %197 = vmatpush2.msra.mxu0 0.0
    %198 = vmatprep.subr.mxu0 0.0
    %199 = vmatpush2.msra.mxu0 0.0
    %200 = vmatprep.subr.mxu0 0.0
    %201 = vmatpush2.msra.mxu0 0.0
    %202 = vmatprep.subr.mxu0 0.0
    %203 = vmatpush2.msra.mxu0 0.0
    %204 = vmatprep.subr.mxu0 0.0
    %205 = vmatpush2.msra.mxu0 0.0
    %206 = vmatprep.subr.mxu0 0.0
    %207 = vmatpush2.msra.mxu0 0.0
    %208 = vmatprep.subr.mxu0 0.0
    %209 = vmatpush2.msra.mxu0 0.0
    %210 = vmatprep.subr.mxu0 0.0
    %211 = vmatpush2.msra.mxu0 0.0
    %212 = vmatprep.subr.mxu0 0.0
    %213 = vmatpush2.msra.mxu0 0.0
    %214 = vmatprep.subr.mxu0 0.0
    %215 = vmatpush2.msra.mxu0 0.0
    %216 = vmatprep.subr.mxu0 0.0
    %217 = vmatpush2.msra.mxu0 0.0
    %218 = vmatprep.subr.mxu0 0.0
    %219 = vmatpush2.msra.mxu0 0.0
    %220 = vmatprep.subr.mxu0 0.0
    %221 = vmatpush2.msra.mxu0 0.0
    %222 = vmatprep.subr.mxu0 0.0
    %223 = vmatpush2.msra.mxu0 0.0
    %224 = vmatprep.mubr.f32.mxu0 0.0
    %v225 = vand.u32 %v46, 4294901760
    %226 = vmatmul.mubr.f32.gmra.mxu0 %v225
    %v227 = vpop.f32.mrf.mxu0
    %v228 = vadd.f32 %v127, %v227
    %v229 = vpop.f32.mrf.mxu0
    %230 = vmatprep.mubr.f32.mxu0 0.0
    %v231 = vand.u32 %v49, 4294901760
    %232 = vmatmul.mubr.f32.gmra.mxu0 %v231
    %v233 = vpop.f32.mrf.mxu0
    %v234 = vadd.f32 %v137, %v233
    %v235 = vpop.f32.mrf.mxu0
    %236 = vdwg.mxu0
    %237 = vmatprep.subr.mxu0 0.0
    %238 = vmatpush1.msra.mxu0 0.0
    %239 = vmatprep.subr.mxu0 0.0
    %240 = vmatpush1.msra.mxu0 0.0
    %241 = vmatprep.subr.mxu0 0.0
    %242 = vmatpush1.msra.mxu0 0.0
    %243 = vmatprep.subr.mxu0 0.0
    %244 = vmatpush1.msra.mxu0 0.0
    %245 = vmatprep.subr.mxu0 0.0
    %246 = vmatpush1.msra.mxu0 0.0
    %247 = vmatprep.subr.mxu0 0.0
    %248 = vmatpush1.msra.mxu0 0.0
    %249 = vmatprep.subr.mxu0 0.0
    %250 = vmatpush1.msra.mxu0 0.0
    %251 = vmatprep.subr.mxu0 0.0
    %252 = vmatpush1.msra.mxu0 0.0
    %253 = vmatprep.subr.mxu0 0.0
    %254 = vmatpush1.msra.mxu0 0.0
    %255 = vmatprep.subr.mxu0 0.0
    %256 = vmatpush1.msra.mxu0 0.0
    %257 = vmatprep.subr.mxu0 0.0
    %258 = vmatpush1.msra.mxu0 0.0
    %259 = vmatprep.subr.mxu0 0.0
    %260 = vmatpush1.msra.mxu0 0.0
    %261 = vmatprep.subr.mxu0 0.0
    %v262 = vand.u32 %v43, 4294901760
    %v263 = vsub.f32 %v43, %v262
    %264 = vmatpush1.msra.mxu0 %v263
    %265 = vmatprep.subr.mxu0 0.0
    %v266 = vand.u32 %v42, 4294901760
    %v267 = vsub.f32 %v42, %v266
    %268 = vmatpush1.msra.mxu0 %v267
    %269 = vmatprep.subr.mxu0 0.0
    %v270 = vand.u32 %v41, 4294901760
    %v271 = vsub.f32 %v41, %v270
    %272 = vmatpush1.msra.mxu0 %v271
    %273 = vmatprep.subr.mxu0 0.0
    %v274 = vand.u32 %v40, 4294901760
    %v275 = vsub.f32 %v40, %v274
    %276 = vmatpush1.msra.mxu0 %v275
    %277 = vmatprep.subr.mxu0 0.0
    %278 = vmatpush2.msra.mxu0 0.0
    %279 = vmatprep.subr.mxu0 0.0
    %280 = vmatpush2.msra.mxu0 0.0
    %281 = vmatprep.subr.mxu0 0.0
    %282 = vmatpush2.msra.mxu0 0.0
    %283 = vmatprep.subr.mxu0 0.0
    %284 = vmatpush2.msra.mxu0 0.0
    %285 = vmatprep.subr.mxu0 0.0
    %286 = vmatpush2.msra.mxu0 0.0
    %287 = vmatprep.subr.mxu0 0.0
    %288 = vmatpush2.msra.mxu0 0.0
    %289 = vmatprep.subr.mxu0 0.0
    %290 = vmatpush2.msra.mxu0 0.0
    %291 = vmatprep.subr.mxu0 0.0
    %292 = vmatpush2.msra.mxu0 0.0
    %293 = vmatprep.subr.mxu0 0.0
    %294 = vmatpush2.msra.mxu0 0.0
    %295 = vmatprep.subr.mxu0 0.0
    %296 = vmatpush2.msra.mxu0 0.0
    %297 = vmatprep.subr.mxu0 0.0
    %298 = vmatpush2.msra.mxu0 0.0
    %299 = vmatprep.subr.mxu0 0.0
    %300 = vmatpush2.msra.mxu0 0.0
    %301 = vmatprep.subr.mxu0 0.0
    %302 = vmatpush2.msra.mxu0 0.0
    %303 = vmatprep.subr.mxu0 0.0
    %304 = vmatpush2.msra.mxu0 0.0
    %305 = vmatprep.subr.mxu0 0.0
    %306 = vmatpush2.msra.mxu0 0.0
    %307 = vmatprep.subr.mxu0 0.0
    %308 = vmatpush2.msra.mxu0 0.0
    %309 = vmatprep.mubr.f32.mxu0 0.0
    %v310 = vand.u32 %v46, 4294901760
    %v311 = vsub.f32 %v46, %v310
    %312 = vmatmul.mubr.f32.gmra.mxu0 %v311
    %v313 = vpop.f32.mrf.mxu0
    %v314 = vadd.f32 %v228, %v313
    %v315 = vpop.f32.mrf.mxu0
    %316 = vmatprep.mubr.f32.mxu0 0.0
    %v317 = vand.u32 %v49, 4294901760
    %v318 = vsub.f32 %v49, %v317
    %319 = vmatmul.mubr.f32.gmra.mxu0 %v318
    %v320 = vpop.f32.mrf.mxu0
    %v321 = vadd.f32 %v234, %v320
    %v322 = vpop.f32.mrf.mxu0
    %323 = vdwg.mxu0
    %324 = vmatprep.subr.mxu0 0.0
    %325 = vmatpush1.msra.mxu0 0.0
    %326 = vmatprep.subr.mxu0 0.0
    %327 = vmatpush1.msra.mxu0 0.0
    %328 = vmatprep.subr.mxu0 0.0
    %329 = vmatpush1.msra.mxu0 0.0
    %330 = vmatprep.subr.mxu0 0.0
    %331 = vmatpush1.msra.mxu0 0.0
    %332 = vmatprep.subr.mxu0 0.0
    %333 = vmatpush1.msra.mxu0 0.0
    %334 = vmatprep.subr.mxu0 0.0
    %335 = vmatpush1.msra.mxu0 0.0
    %336 = vmatprep.subr.mxu0 0.0
    %337 = vmatpush1.msra.mxu0 0.0
    %338 = vmatprep.subr.mxu0 0.0
    %339 = vmatpush1.msra.mxu0 0.0
    %340 = vmatprep.subr.mxu0 0.0
    %341 = vmatpush1.msra.mxu0 0.0
    %342 = vmatprep.subr.mxu0 0.0
    %343 = vmatpush1.msra.mxu0 0.0
    %344 = vmatprep.subr.mxu0 0.0
    %345 = vmatpush1.msra.mxu0 0.0
    %346 = vmatprep.subr.mxu0 0.0
    %347 = vmatpush1.msra.mxu0 0.0
    %348 = vmatprep.subr.mxu0 0.0
    %v349 = vand.u32 %v43, 4294901760
    %350 = vmatpush1.msra.mxu0 %v349
    %351 = vmatprep.subr.mxu0 0.0
    %v352 = vand.u32 %v42, 4294901760
    %353 = vmatpush1.msra.mxu0 %v352
    %354 = vmatprep.subr.mxu0 0.0
    %v355 = vand.u32 %v41, 4294901760
    %356 = vmatpush1.msra.mxu0 %v355
    %357 = vmatprep.subr.mxu0 0.0
    %v358 = vand.u32 %v40, 4294901760
    %359 = vmatpush1.msra.mxu0 %v358
    %360 = vmatprep.subr.mxu0 0.0
    %361 = vmatpush2.msra.mxu0 0.0
    %362 = vmatprep.subr.mxu0 0.0
    %363 = vmatpush2.msra.mxu0 0.0
    %364 = vmatprep.subr.mxu0 0.0
    %365 = vmatpush2.msra.mxu0 0.0
    %366 = vmatprep.subr.mxu0 0.0
    %367 = vmatpush2.msra.mxu0 0.0
    %368 = vmatprep.subr.mxu0 0.0
    %369 = vmatpush2.msra.mxu0 0.0
    %370 = vmatprep.subr.mxu0 0.0
    %371 = vmatpush2.msra.mxu0 0.0
    %372 = vmatprep.subr.mxu0 0.0
    %373 = vmatpush2.msra.mxu0 0.0
    %374 = vmatprep.subr.mxu0 0.0
    %375 = vmatpush2.msra.mxu0 0.0
    %376 = vmatprep.subr.mxu0 0.0
    %377 = vmatpush2.msra.mxu0 0.0
    %378 = vmatprep.subr.mxu0 0.0
    %379 = vmatpush2.msra.mxu0 0.0
    %380 = vmatprep.subr.mxu0 0.0
    %381 = vmatpush2.msra.mxu0 0.0
    %382 = vmatprep.subr.mxu0 0.0
    %383 = vmatpush2.msra.mxu0 0.0
    %384 = vmatprep.subr.mxu0 0.0
    %385 = vmatpush2.msra.mxu0 0.0
    %386 = vmatprep.subr.mxu0 0.0
    %387 = vmatpush2.msra.mxu0 0.0
    %388 = vmatprep.subr.mxu0 0.0
    %389 = vmatpush2.msra.mxu0 0.0
    %390 = vmatprep.subr.mxu0 0.0
    %391 = vmatpush2.msra.mxu0 0.0
    %392 = vmatprep.mubr.f32.mxu0 0.0
    %v393 = vand.u32 %v46, 4294901760
    %v394 = vsub.f32 %v46, %v393
    %v395 = vand.u32 %v394, 4294901760
    %396 = vmatmul.mubr.f32.gmra.mxu0 %v395
    %v397 = vpop.f32.mrf.mxu0
    %v398 = vadd.f32 %v314, %v397
    %v399 = vpop.f32.mrf.mxu0
    %400 = vmatprep.mubr.f32.mxu0 0.0
    %v401 = vand.u32 %v49, 4294901760
    %v402 = vsub.f32 %v49, %v401
    %v403 = vand.u32 %v402, 4294901760
    %404 = vmatmul.mubr.f32.gmra.mxu0 %v403
    %v405 = vpop.f32.mrf.mxu0
    %v406 = vadd.f32 %v321, %v405
    %v407 = vpop.f32.mrf.mxu0
    %408 = vdwg.mxu0
    %409 = vmatprep.subr.mxu0 0.0
    %410 = vmatpush1.msra.mxu0 0.0
    %411 = vmatprep.subr.mxu0 0.0
    %412 = vmatpush1.msra.mxu0 0.0
    %413 = vmatprep.subr.mxu0 0.0
    %414 = vmatpush1.msra.mxu0 0.0
    %415 = vmatprep.subr.mxu0 0.0
    %416 = vmatpush1.msra.mxu0 0.0
    %417 = vmatprep.subr.mxu0 0.0
    %418 = vmatpush1.msra.mxu0 0.0
    %419 = vmatprep.subr.mxu0 0.0
    %420 = vmatpush1.msra.mxu0 0.0
    %421 = vmatprep.subr.mxu0 0.0
    %422 = vmatpush1.msra.mxu0 0.0
    %423 = vmatprep.subr.mxu0 0.0
    %424 = vmatpush1.msra.mxu0 0.0
    %425 = vmatprep.subr.mxu0 0.0
    %426 = vmatpush1.msra.mxu0 0.0
    %427 = vmatprep.subr.mxu0 0.0
    %428 = vmatpush1.msra.mxu0 0.0
    %429 = vmatprep.subr.mxu0 0.0
    %430 = vmatpush1.msra.mxu0 0.0
    %431 = vmatprep.subr.mxu0 0.0
    %432 = vmatpush1.msra.mxu0 0.0
    %433 = vmatprep.subr.mxu0 0.0
    %v434 = vand.u32 %v43, 4294901760
    %v435 = vsub.f32 %v43, %v434
    %v436 = vand.u32 %v435, 4294901760
    %437 = vmatpush1.msra.mxu0 %v436
    %438 = vmatprep.subr.mxu0 0.0
    %v439 = vand.u32 %v42, 4294901760
    %v440 = vsub.f32 %v42, %v439
    %v441 = vand.u32 %v440, 4294901760
    %442 = vmatpush1.msra.mxu0 %v441
    %443 = vmatprep.subr.mxu0 0.0
    %v444 = vand.u32 %v41, 4294901760
    %v445 = vsub.f32 %v41, %v444
    %v446 = vand.u32 %v445, 4294901760
    %447 = vmatpush1.msra.mxu0 %v446
    %448 = vmatprep.subr.mxu0 0.0
    %v449 = vand.u32 %v40, 4294901760
    %v450 = vsub.f32 %v40, %v449
    %v451 = vand.u32 %v450, 4294901760
    %452 = vmatpush1.msra.mxu0 %v451
    %453 = vmatprep.subr.mxu0 0.0
    %454 = vmatpush2.msra.mxu0 0.0
    %455 = vmatprep.subr.mxu0 0.0
    %456 = vmatpush2.msra.mxu0 0.0
    %457 = vmatprep.subr.mxu0 0.0
    %458 = vmatpush2.msra.mxu0 0.0
    %459 = vmatprep.subr.mxu0 0.0
    %460 = vmatpush2.msra.mxu0 0.0
    %461 = vmatprep.subr.mxu0 0.0
    %462 = vmatpush2.msra.mxu0 0.0
    %463 = vmatprep.subr.mxu0 0.0
    %464 = vmatpush2.msra.mxu0 0.0
    %465 = vmatprep.subr.mxu0 0.0
    %466 = vmatpush2.msra.mxu0 0.0
    %467 = vmatprep.subr.mxu0 0.0
    %468 = vmatpush2.msra.mxu0 0.0
    %469 = vmatprep.subr.mxu0 0.0
    %470 = vmatpush2.msra.mxu0 0.0
    %471 = vmatprep.subr.mxu0 0.0
    %472 = vmatpush2.msra.mxu0 0.0
    %473 = vmatprep.subr.mxu0 0.0
    %474 = vmatpush2.msra.mxu0 0.0
    %475 = vmatprep.subr.mxu0 0.0
    %476 = vmatpush2.msra.mxu0 0.0
    %477 = vmatprep.subr.mxu0 0.0
    %478 = vmatpush2.msra.mxu0 0.0
    %479 = vmatprep.subr.mxu0 0.0
    %480 = vmatpush2.msra.mxu0 0.0
    %481 = vmatprep.subr.mxu0 0.0
    %482 = vmatpush2.msra.mxu0 0.0
    %483 = vmatprep.subr.mxu0 0.0
    %484 = vmatpush2.msra.mxu0 0.0
    %485 = vmatprep.mubr.f32.mxu0 0.0
    %v486 = vand.u32 %v46, 4294901760
    %487 = vmatmul.mubr.f32.gmra.mxu0 %v486
    %v488 = vpop.f32.mrf.mxu0
    %v489 = vadd.f32 %v398, %v488
    %v490 = vpop.f32.mrf.mxu0
    %491 = vmatprep.mubr.f32.mxu0 0.0
    %v492 = vand.u32 %v49, 4294901760
    %493 = vmatmul.mubr.f32.gmra.mxu0 %v492
    %v494 = vpop.f32.mrf.mxu0
    %v495 = vadd.f32 %v406, %v494
    %v496 = vpop.f32.mrf.mxu0
    %497 = vdwg.mxu0
    %498 = vmatprep.subr.mxu0 0.0
    %499 = vmatpush1.msra.mxu0 0.0
    %500 = vmatprep.subr.mxu0 0.0
    %501 = vmatpush1.msra.mxu0 0.0
    %502 = vmatprep.subr.mxu0 0.0
    %503 = vmatpush1.msra.mxu0 0.0
    %504 = vmatprep.subr.mxu0 0.0
    %505 = vmatpush1.msra.mxu0 0.0
    %506 = vmatprep.subr.mxu0 0.0
    %507 = vmatpush1.msra.mxu0 0.0
    %508 = vmatprep.subr.mxu0 0.0
    %509 = vmatpush1.msra.mxu0 0.0
    %510 = vmatprep.subr.mxu0 0.0
    %511 = vmatpush1.msra.mxu0 0.0
    %512 = vmatprep.subr.mxu0 0.0
    %513 = vmatpush1.msra.mxu0 0.0
    %514 = vmatprep.subr.mxu0 0.0
    %515 = vmatpush1.msra.mxu0 0.0
    %516 = vmatprep.subr.mxu0 0.0
    %517 = vmatpush1.msra.mxu0 0.0
    %518 = vmatprep.subr.mxu0 0.0
    %519 = vmatpush1.msra.mxu0 0.0
    %520 = vmatprep.subr.mxu0 0.0
    %521 = vmatpush1.msra.mxu0 0.0
    %522 = vmatprep.subr.mxu0 0.0
    %v523 = vand.u32 %v43, 4294901760
    %524 = vmatpush1.msra.mxu0 %v523
    %525 = vmatprep.subr.mxu0 0.0
    %v526 = vand.u32 %v42, 4294901760
    %527 = vmatpush1.msra.mxu0 %v526
    %528 = vmatprep.subr.mxu0 0.0
    %v529 = vand.u32 %v41, 4294901760
    %530 = vmatpush1.msra.mxu0 %v529
    %531 = vmatprep.subr.mxu0 0.0
    %v532 = vand.u32 %v40, 4294901760
    %533 = vmatpush1.msra.mxu0 %v532
    %534 = vmatprep.subr.mxu0 0.0
    %535 = vmatpush2.msra.mxu0 0.0
    %536 = vmatprep.subr.mxu0 0.0
    %537 = vmatpush2.msra.mxu0 0.0
    %538 = vmatprep.subr.mxu0 0.0
    %539 = vmatpush2.msra.mxu0 0.0
    %540 = vmatprep.subr.mxu0 0.0
    %541 = vmatpush2.msra.mxu0 0.0
    %542 = vmatprep.subr.mxu0 0.0
    %543 = vmatpush2.msra.mxu0 0.0
    %544 = vmatprep.subr.mxu0 0.0
    %545 = vmatpush2.msra.mxu0 0.0
    %546 = vmatprep.subr.mxu0 0.0
    %547 = vmatpush2.msra.mxu0 0.0
    %548 = vmatprep.subr.mxu0 0.0
    %549 = vmatpush2.msra.mxu0 0.0
    %550 = vmatprep.subr.mxu0 0.0
    %551 = vmatpush2.msra.mxu0 0.0
    %552 = vmatprep.subr.mxu0 0.0
    %553 = vmatpush2.msra.mxu0 0.0
    %554 = vmatprep.subr.mxu0 0.0
    %555 = vmatpush2.msra.mxu0 0.0
    %556 = vmatprep.subr.mxu0 0.0
    %557 = vmatpush2.msra.mxu0 0.0
    %558 = vmatprep.subr.mxu0 0.0
    %559 = vmatpush2.msra.mxu0 0.0
    %560 = vmatprep.subr.mxu0 0.0
    %561 = vmatpush2.msra.mxu0 0.0
    %562 = vmatprep.subr.mxu0 0.0
    %563 = vmatpush2.msra.mxu0 0.0
    %564 = vmatprep.subr.mxu0 0.0
    %565 = vmatpush2.msra.mxu0 0.0
    %566 = vmatprep.mubr.f32.mxu0 0.0
    %v567 = vand.u32 %v46, 4294901760
    %568 = vmatmul.mubr.f32.gmra.mxu0 %v567
    %v569 = vpop.f32.mrf.mxu0
    %v570 = vadd.f32 %v489, %v569
    %v571 = vpop.f32.mrf.mxu0
    %572 = vmatprep.mubr.f32.mxu0 0.0
    %v573 = vand.u32 %v49, 4294901760
    %574 = vmatmul.mubr.f32.gmra.mxu0 %v573
    %v575 = vpop.f32.mrf.mxu0
    %v576 = vadd.f32 %v495, %v575
    %v577 = vpop.f32.mrf.mxu0
    %578 = vdwg.mxu0
    %579 = vst [vmem:[#allocation5] sm:$0xff] %v570
    %580 = vst [vmem:[#allocation5 + $0x8] sm:$0xff] %v576
    // Predicated region
    $region14: #{tpu_custom_call.1} parent=1 // pred_check
      _
    $region15: #{tpu_custom_call.1} parent=1 // pred_check_branch
      %582 = sbr.rel (0) target = $region17
    $region16: #{tpu_custom_call.1} parent=1 // pred_region
      %s584 = ssub.s32 256, 256
      %585 = vsyncadd [#allocation4], %s584
      %s586 = sshll.u32 [#allocation5], 4
      %s587 = int_to_ptr.vmem [resolvable:$true] %s586
      %592 = dma.vmem_to_hbm [thread:$0]  %s587, 256, %s2, [#allocation4], 128, 128, 8
    $region17: #{tpu_custom_call.1} parent=1 // pred_fallthru
      _
    // Predicated region
    $region18: #{tpu_custom_call.1} parent=1 // pred_check
      _
    $region19: #{tpu_custom_call.1} parent=1 // pred_check_branch
      %594 = sbr.rel (0) target = $region21
    $region20: #{tpu_custom_call.1} parent=1 // pred_region
      %595 = dma.done [#allocation4], 256
    $region21: #{tpu_custom_call.1} parent=1 // pred_fallthru
      _
    %596 = vsyncpa [#allocation3], 1
    %597 = vsyncpa [#allocation4], 1

</llo_original>
